<compile_context>
chip_gen: v7x
topology: tpu7x:2x2x1
jax: 0.10.0
libtpu: 0.0.40
codegen_flags: <defaults>
</compile_context>

<pallas_src>
import jax
import jax.numpy as jnp
from jax.experimental import pallas as pl
from jax.experimental.pallas import tpu as pltpu


def _round_up(n, m):
    return ((n + m - 1) // m) * m


def autoencoder_kernel(x_ref, w1_ref, b1_ref, w2_ref, b2_ref, enc_ref, dec_ref):
    # x_ref:  (TB, D_in)     streamed VMEM tile of the batch
    # w1_ref: (D_in, D_enc), b1_ref: (1, D_enc)   -- resident
    # w2_ref: (D_enc, D_in), b2_ref: (1, D_in)    -- resident
    x = x_ref[...]

    # Encoder: Linear + ReLU  (MXU matmul, f32 accumulate)
    h = jnp.dot(x, w1_ref[...], preferred_element_type=jnp.float32) + b1_ref[...]
    enc = jnp.maximum(h, 0.0)
    enc_ref[...] = enc.astype(enc_ref.dtype)

    # Decoder: Linear + Sigmoid (sigmoid stays in f32 on the EUP path)
    d = jnp.dot(enc, w2_ref[...], preferred_element_type=jnp.float32) + b2_ref[...]
    dec_ref[...] = jax.nn.sigmoid(d).astype(dec_ref.dtype)


def autoencoder_forward(x, w1, b1, w2, b2, *, batch_tile=2048):
    """x: [B, D_in]; w1: [D_in, D_enc]; b1: [1, D_enc]; w2: [D_enc, D_in];
    b2: [1, D_in].  Returns (encoded [B, D_enc], decoded [B, D_in])."""
    B, d_in = x.shape
    d_enc = w1.shape[1]

    # Batch tile: multiple of 8 (sublane alignment), capped so the grid has at
    # least 2 steps whenever B > 8 (keeps both v7x TensorCores busy).
    bt = min(batch_tile, _round_up(max(-(-B // 2), 1), 8))
    bt = max(8, _round_up(bt, 8))
    grid = (pl.cdiv(B, bt),)

    # Scoped-VMEM budget: double-buffered x/enc/dec tiles + resident weights.
    itemsize = jnp.dtype(x.dtype).itemsize
    tile_bytes = 2 * itemsize * bt * (2 * d_in + d_enc)
    wgt_bytes = 2 * itemsize * (2 * d_in * d_enc + d_in + d_enc)
    vmem_limit = int(min(max(tile_bytes + wgt_bytes + (8 << 20), 16 << 20), 48 << 20))

    enc, dec = pl.pallas_call(
        autoencoder_kernel,
        out_shape=(
            jax.ShapeDtypeStruct((B, d_enc), x.dtype),
            jax.ShapeDtypeStruct((B, d_in), x.dtype),
        ),
        grid_spec=pltpu.PrefetchScalarGridSpec(
            num_scalar_prefetch=0,
            grid=grid,
            in_specs=[
                # streamed batch tile of the input
                pl.BlockSpec((bt, d_in), lambda i: (i, 0)),
                # weights / biases: full arrays, resident every step
                pl.BlockSpec((d_in, d_enc), lambda i: (0, 0)),
                pl.BlockSpec((1, d_enc), lambda i: (0, 0)),
                pl.BlockSpec((d_enc, d_in), lambda i: (0, 0)),
                pl.BlockSpec((1, d_in), lambda i: (0, 0)),
            ],
            out_specs=[
                pl.BlockSpec((bt, d_enc), lambda i: (i, 0)),
                pl.BlockSpec((bt, d_in), lambda i: (i, 0)),
            ],
        ),
        compiler_params=pltpu.CompilerParams(
            dimension_semantics=("parallel",),
            vmem_limit_bytes=vmem_limit,
        ),
    )(x, w1, b1, w2, b2)
    return enc, dec


def init_params(key, input_dim, encoding_dim):
    """Deterministic init mimicking PyTorch nn.Linear default
    (U[-1/sqrt(fan_in), 1/sqrt(fan_in)]), stored pre-transposed."""
    k1, k2, k3, k4 = jax.random.split(key, 4)
    bound1 = 1.0 / jnp.sqrt(input_dim)
    bound2 = 1.0 / jnp.sqrt(encoding_dim)
    w1 = jax.random.uniform(k1, (input_dim, encoding_dim), jnp.float32, -bound1, bound1)
    b1 = jax.random.uniform(k2, (1, encoding_dim), jnp.float32, -bound1, bound1)
    w2 = jax.random.uniform(k3, (encoding_dim, input_dim), jnp.float32, -bound2, bound2)
    b2 = jax.random.uniform(k4, (1, input_dim), jnp.float32, -bound2, bound2)
    return w1, b1, w2, b2


def _reference(x, w1, b1, w2, b2):
    enc = jnp.maximum(x @ w1 + b1, 0.0)
    dec = jax.nn.sigmoid(enc @ w2 + b2)
    return enc, dec


if __name__ == "__main__":
    # Shapes consistent with the module: flattened time-series windows.
    input_dim = 256      # X_train.reshape(N, -1).shape[1]
    encoding_dim = 64    # as in the script

    key = jax.random.PRNGKey(0)
    kx, kp, kx2 = jax.random.split(key, 3)
    w1, b1, w2, b2 = init_params(kp, input_dim, encoding_dim)

    # Small single-tile case.
    batch = 8
    x = jax.random.uniform(kx, (batch, input_dim), jnp.float32)
    encoded, decoded = autoencoder_forward(x, w1, b1, w2, b2)
    jax.block_until_ready((encoded, decoded))
    enc_ref, dec_ref = _reference(x, w1, b1, w2, b2)
    assert encoded.shape == (batch, encoding_dim)
    assert decoded.shape == (batch, input_dim)
    assert jnp.allclose(encoded, enc_ref, atol=1e-5)
    assert jnp.allclose(decoded, dec_ref, atol=1e-5)

    # Multi-step grid with a ragged last block (no wrapper-side padding).
    batch2 = 200
    x2 = jax.random.uniform(kx2, (batch2, input_dim), jnp.float32)
    enc2, dec2 = autoencoder_forward(x2, w1, b1, w2, b2, batch_tile=128)
    jax.block_until_ready((enc2, dec2))
    enc2_ref, dec2_ref = _reference(x2, w1, b1, w2, b2)
    assert enc2.shape == (batch2, encoding_dim)
    assert dec2.shape == (batch2, input_dim)
    assert jnp.allclose(enc2, enc2_ref, atol=1e-5)
    assert jnp.allclose(dec2, dec2_ref, atol=1e-5)

    # Default-tile path (tile capped to B/2 so the grid still has 2 steps).
    enc3, dec3 = autoencoder_forward(x2, w1, b1, w2, b2)
    jax.block_until_ready((enc3, dec3))
    assert jnp.allclose(enc3, enc2_ref, atol=1e-5)
    assert jnp.allclose(dec3, dec2_ref, atol=1e-5)

    print("KERNEL_OK")
</pallas_src>

<mosaic_0001>
module attributes {stable_mosaic.version = 11 : i64} {
  func.func @autoencoder_kernel(%arg0: i32, %arg1: memref<8x256xf32, #tpu.memory_space<vmem>>, %arg2: memref<256x64xf32, #tpu.memory_space<vmem>>, %arg3: memref<1x64xf32, #tpu.memory_space<vmem>>, %arg4: memref<64x256xf32, #tpu.memory_space<vmem>>, %arg5: memref<1x256xf32, #tpu.memory_space<vmem>>, %arg6: memref<8x64xf32, #tpu.memory_space<vmem>>, %arg7: memref<8x256xf32, #tpu.memory_space<vmem>>) attributes {dimension_semantics = [#tpu.dimension_semantics<parallel>], iteration_bounds = array<i64: 1>, scalar_prefetch = 0 : i64, scratch_operands = 0 : i64, tpu.core_type = #tpu.core_type<tc>, window_params = [{transform_indices = @transform_0, window_bounds = array<i64: 8, 256>}, {pipeline_mode = #tpu.pipeline_mode<synchronous>, transform_indices = @transform_1, window_bounds = array<i64: 256, 64>}, {pipeline_mode = #tpu.pipeline_mode<synchronous>, transform_indices = @transform_2, window_bounds = array<i64: 1, 64>}, {pipeline_mode = #tpu.pipeline_mode<synchronous>, transform_indices = @transform_3, window_bounds = array<i64: 64, 256>}, {pipeline_mode = #tpu.pipeline_mode<synchronous>, transform_indices = @transform_4, window_bounds = array<i64: 1, 256>}, {transform_indices = @transform_5, window_bounds = array<i64: 8, 64>}, {transform_indices = @transform_6, window_bounds = array<i64: 8, 256>}]} {
    %c0 = arith.constant 0 : index
    %c0_0 = arith.constant 0 : index
    %0 = vector.load %arg1[%c0, %c0_0] : memref<8x256xf32, #tpu.memory_space<vmem>>, vector<8x256xf32>
    %c0_1 = arith.constant 0 : index
    %c0_2 = arith.constant 0 : index
    %1 = vector.load %arg2[%c0_1, %c0_2] : memref<256x64xf32, #tpu.memory_space<vmem>>, vector<256x64xf32>
    %cst = arith.constant dense<0.000000e+00> : vector<8x64xf32>
    %2 = tpu.matmul %0, %1, %cst {dimension_numbers = #tpu.dot_dimension_numbers<[1], [0], [0], [1], [0, 0, 1, 1], [], []>} : vector<8x256xf32>, vector<256x64xf32>, vector<8x64xf32> -> vector<8x64xf32>
    %c0_3 = arith.constant 0 : index
    %c0_4 = arith.constant 0 : index
    %3 = vector.load %arg3[%c0_3, %c0_4] : memref<1x64xf32, #tpu.memory_space<vmem>>, vector<1x64xf32>
    %4 = vector.broadcast %3 : vector<1x64xf32> to vector<8x64xf32>
    %5 = arith.addf %2, %4 : vector<8x64xf32>
    %cst_5 = arith.constant 0.000000e+00 : f32
    %6 = vector.broadcast %cst_5 : f32 to vector<8x64xf32>
    %7 = arith.maximumf %5, %6 : vector<8x64xf32>
    %c0_6 = arith.constant 0 : index
    %c0_7 = arith.constant 0 : index
    %8 = vector.load %arg6[%c0_6, %c0_7] : memref<8x64xf32, #tpu.memory_space<vmem>>, vector<8x64xf32>
    tpu.vector_store %arg6[%c0_6, %c0_7], %7 {strides = array<i32>} : memref<8x64xf32, #tpu.memory_space<vmem>>, vector<8x64xf32>,
    %c0_8 = arith.constant 0 : index
    %c0_9 = arith.constant 0 : index
    %9 = vector.load %arg4[%c0_8, %c0_9] : memref<64x256xf32, #tpu.memory_space<vmem>>, vector<64x256xf32>
    %cst_10 = arith.constant dense<0.000000e+00> : vector<8x256xf32>
    %10 = tpu.matmul %7, %9, %cst_10 {dimension_numbers = #tpu.dot_dimension_numbers<[1], [0], [0], [1], [0, 0, 1, 1], [], []>} : vector<8x64xf32>, vector<64x256xf32>, vector<8x256xf32> -> vector<8x256xf32>
    %c0_11 = arith.constant 0 : index
    %c0_12 = arith.constant 0 : index
    %11 = vector.load %arg5[%c0_11, %c0_12] : memref<1x256xf32, #tpu.memory_space<vmem>>, vector<1x256xf32>
    %12 = vector.broadcast %11 : vector<1x256xf32> to vector<8x256xf32>
    %13 = arith.addf %10, %12 : vector<8x256xf32>
    %14 = arith.negf %13 : vector<8x256xf32>
    %15 = math.exp %14 : vector<8x256xf32>
    %cst_13 = arith.constant 1.000000e+00 : f32
    %16 = vector.broadcast %cst_13 : f32 to vector<8x256xf32>
    %17 = arith.addf %16, %15 : vector<8x256xf32>
    %18 = arith.divf %16, %17 : vector<8x256xf32>
    %c0_14 = arith.constant 0 : index
    %c0_15 = arith.constant 0 : index
    %19 = vector.load %arg7[%c0_14, %c0_15] : memref<8x256xf32, #tpu.memory_space<vmem>>, vector<8x256xf32>
    tpu.vector_store %arg7[%c0_14, %c0_15], %18 {strides = array<i32>} : memref<8x256xf32, #tpu.memory_space<vmem>>, vector<8x256xf32>,
    return
  }
  func.func @transform_0(%arg0: i32) -> (i32, i32) {
    %c0_i32 = arith.constant 0 : i32
    %c0_i32_0 = arith.constant 0 : i32
    return %arg0, %c0_i32 : i32, i32
  }
  func.func @transform_1(%arg0: i32) -> (i32, i32) {
    %c0_i32 = arith.constant 0 : i32
    %c0_i32_0 = arith.constant 0 : i32
    %c0_i32_1 = arith.constant 0 : i32
    return %c0_i32, %c0_i32_0 : i32, i32
  }
  func.func @transform_2(%arg0: i32) -> (i32, i32) {
    %c0_i32 = arith.constant 0 : i32
    %c0_i32_0 = arith.constant 0 : i32
    %c0_i32_1 = arith.constant 0 : i32
    return %c0_i32, %c0_i32_0 : i32, i32
  }
  func.func @transform_3(%arg0: i32) -> (i32, i32) {
    %c0_i32 = arith.constant 0 : i32
    %c0_i32_0 = arith.constant 0 : i32
    %c0_i32_1 = arith.constant 0 : i32
    return %c0_i32, %c0_i32_0 : i32, i32
  }
  func.func @transform_4(%arg0: i32) -> (i32, i32) {
    %c0_i32 = arith.constant 0 : i32
    %c0_i32_0 = arith.constant 0 : i32
    %c0_i32_1 = arith.constant 0 : i32
    return %c0_i32, %c0_i32_0 : i32, i32
  }
  func.func @transform_5(%arg0: i32) -> (i32, i32) {
    %c0_i32 = arith.constant 0 : i32
    %c0_i32_0 = arith.constant 0 : i32
    return %arg0, %c0_i32 : i32, i32
  }
  func.func @transform_6(%arg0: i32) -> (i32, i32) {
    %c0_i32 = arith.constant 0 : i32
    %c0_i32_0 = arith.constant 0 : i32
    return %arg0, %c0_i32 : i32, i32
  }
}

</mosaic_0001>

<llo_original>
// kernel: tpu_custom_call.1
$region0: #{tpu_custom_call.1}
  #allocation0 [shape = 'u32[]', space=smem, size = 0x4, offset = 0x4, fixed_abs, tag = 'smem constant byte address 0x4 - core index']
  #allocation1 [shape = 'u32[144,128]{1,0:T(1,128)}', space=vmem, size = 0x12000, scoped, tag = 'internal scratch']
  %s0 = inlined_call_operand.vmem [shape: f32[8,256], index: 0, kind: input, shape index: {}]
  %s1 = inlined_call_operand.vmem [shape: f32[256,64], index: 1, kind: input, shape index: {}]
  %s2 = inlined_call_operand.vmem [shape: f32[1,64], index: 2, kind: input, shape index: {}]
  %s3 = inlined_call_operand.vmem [shape: f32[64,256], index: 3, kind: input, shape index: {}]
  %s4 = inlined_call_operand.vmem [shape: f32[1,256], index: 4, kind: input, shape index: {}]
  %s5 = inlined_call_operand.hbm [shape: f32[8,64], index: 5, kind: output, shape index: {0}]
  %s6 = inlined_call_operand.hbm [shape: f32[8,256], index: 6, kind: output, shape index: {1}]
  %7 = xla_tuple %s5, %s6
  %s8 = sld [smem:[#allocation0]]
  $region38: #{tpu_custom_call.1} parent=0
    _
  %s10 = ssub.s32 1, %s8
  %s11 = scalar_select 0, %s10, %s8
  $region1: #{tpu_custom_call.1} parent=0
    #allocation2 [shape = 'u8[4096]{0}', space=vmem, size = 0x1000, scoped, tag = 'output window, operand 0, single buffered']
    #allocation3 [shape = 's32[1]{0}', space=sflag, size = 0x4, scoped, tag = 'scoped memory for tpu_custom_call.1']
    #allocation4 [shape = 'u8[8192]{0}', space=vmem, size = 0x2000, scoped, tag = 'output window, operand 1, single buffered']
    #allocation5 [shape = 's32[1]{0}', space=sflag, size = 0x4, scoped, tag = 'scoped memory for tpu_custom_call.1']
    %12 = vsyncpa [#allocation3], 0
    %13 = vsyncpa [#allocation5], 0
    // Predicated region
    $region2: #{tpu_custom_call.1} parent=1 // pred_check
      _
    $region3: #{tpu_custom_call.1} parent=1 // pred_check_branch
      %15 = sbr.rel (0) target = $region5
    $region4: #{tpu_custom_call.1} parent=1 // pred_region
      _
    $region5: #{tpu_custom_call.1} parent=1 // pred_fallthru
      _
    // Predicated region
    $region6: #{tpu_custom_call.1} parent=1 // pred_check
      _
    $region7: #{tpu_custom_call.1} parent=1 // pred_check_branch
      %17 = sbr.rel (0) target = $region9
    $region8: #{tpu_custom_call.1} parent=1 // pred_region
      _
    $region9: #{tpu_custom_call.1} parent=1 // pred_fallthru
      _
    // Predicated region
    $region10: #{tpu_custom_call.1} parent=1 // pred_check
      _
    $region11: #{tpu_custom_call.1} parent=1 // pred_check_branch
      %19 = sbr.rel (0) target = $region13
    $region12: #{tpu_custom_call.1} parent=1 // pred_region
      _
    $region13: #{tpu_custom_call.1} parent=1 // pred_fallthru
      _
    // Predicated region
    $region14: #{tpu_custom_call.1} parent=1 // pred_check
      _
    $region15: #{tpu_custom_call.1} parent=1 // pred_check_branch
      %21 = sbr.rel (0) target = $region17
    $region16: #{tpu_custom_call.1} parent=1 // pred_region
      _
    $region17: #{tpu_custom_call.1} parent=1 // pred_fallthru
      _
    // Predicated region
    $region18: #{tpu_custom_call.1} parent=1 // pred_check
      _
    $region19: #{tpu_custom_call.1} parent=1 // pred_check_branch
      %23 = sbr.rel (0) target = $region21
    $region20: #{tpu_custom_call.1} parent=1 // pred_region
      _
    $region21: #{tpu_custom_call.1} parent=1 // pred_fallthru
      _
    %v24 = vld [vmem:[%s0] sm:$0xff]
    %v25 = vld [vmem:[%s0 + $0x8] sm:$0xff]
    %v26 = vld [vmem:[%s1] sm:$0xff]
    %v27 = vld [vmem:[%s1 + $0x8] sm:$0xff]
    %v28 = vld [vmem:[%s1 + $0x10] sm:$0xff]
    %v29 = vld [vmem:[%s1 + $0x18] sm:$0xff]
    %v30 = vld [vmem:[%s1 + $0x20] sm:$0xff]
    %v31 = vld [vmem:[%s1 + $0x28] sm:$0xff]
    %v32 = vld [vmem:[%s1 + $0x30] sm:$0xff]
    %v33 = vld [vmem:[%s1 + $0x38] sm:$0xff]
    %v34 = vld [vmem:[%s1 + $0x40] sm:$0xff]
    %v35 = vld [vmem:[%s1 + $0x48] sm:$0xff]
    %v36 = vld [vmem:[%s1 + $0x50] sm:$0xff]
    %v37 = vld [vmem:[%s1 + $0x58] sm:$0xff]
    %v38 = vld [vmem:[%s1 + $0x60] sm:$0xff]
    %v39 = vld [vmem:[%s1 + $0x68] sm:$0xff]
    %v40 = vld [vmem:[%s1 + $0x70] sm:$0xff]
    %v41 = vld [vmem:[%s1 + $0x78] sm:$0xff]
    %v42 = vld [vmem:[%s1 + $0x80] sm:$0xff]
    %v43 = vld [vmem:[%s1 + $0x88] sm:$0xff]
    %v44 = vld [vmem:[%s1 + $0x90] sm:$0xff]
    %v45 = vld [vmem:[%s1 + $0x98] sm:$0xff]
    %v46 = vld [vmem:[%s1 + $0xa0] sm:$0xff]
    %v47 = vld [vmem:[%s1 + $0xa8] sm:$0xff]
    %v48 = vld [vmem:[%s1 + $0xb0] sm:$0xff]
    %v49 = vld [vmem:[%s1 + $0xb8] sm:$0xff]
    %v50 = vld [vmem:[%s1 + $0xc0] sm:$0xff]
    %v51 = vld [vmem:[%s1 + $0xc8] sm:$0xff]
    %v52 = vld [vmem:[%s1 + $0xd0] sm:$0xff]
    %v53 = vld [vmem:[%s1 + $0xd8] sm:$0xff]
    %v54 = vld [vmem:[%s1 + $0xe0] sm:$0xff]
    %v55 = vld [vmem:[%s1 + $0xe8] sm:$0xff]
    %v56 = vld [vmem:[%s1 + $0xf0] sm:$0xff]
    %v57 = vld [vmem:[%s1 + $0xf8] sm:$0xff]
    %v58 = vld [vmem:[%s2] sm:$0x1]
    %v60 = vlaneseq
    %v61 = vshrl.u32 %v60, 7
    %v62 = vsub.s32 0, %v61
    %v63 = vrot.slane %v58, %v62
    %65 = vmatprep.subr.mxu0 0.0
    %66 = vmatpush1.msra.mxu0 %v26
    %67 = vmatprep.subr.mxu0 0.0
    %68 = vmatpush1.msra.mxu0 %v27
    %69 = vmatprep.subr.mxu0 0.0
    %70 = vmatpush1.msra.mxu0 %v28
    %71 = vmatprep.subr.mxu0 0.0
    %72 = vmatpush1.msra.mxu0 %v29
    %73 = vmatprep.subr.mxu0 0.0
    %74 = vmatpush1.msra.mxu0 %v30
    %75 = vmatprep.subr.mxu0 0.0
    %76 = vmatpush1.msra.mxu0 %v31
    %77 = vmatprep.subr.mxu0 0.0
    %78 = vmatpush1.msra.mxu0 %v32
    %79 = vmatprep.subr.mxu0 0.0
    %80 = vmatpush1.msra.mxu0 %v33
    %81 = vmatprep.subr.mxu0 0.0
    %82 = vmatpush1.msra.mxu0 %v34
    %83 = vmatprep.subr.mxu0 0.0
    %84 = vmatpush1.msra.mxu0 %v35
    %85 = vmatprep.subr.mxu0 0.0
    %86 = vmatpush1.msra.mxu0 %v36
    %87 = vmatprep.subr.mxu0 0.0
    %88 = vmatpush1.msra.mxu0 %v37
    %89 = vmatprep.subr.mxu0 0.0
    %90 = vmatpush1.msra.mxu0 %v38
    %91 = vmatprep.subr.mxu0 0.0
    %92 = vmatpush1.msra.mxu0 %v39
    %93 = vmatprep.subr.mxu0 0.0
    %94 = vmatpush1.msra.mxu0 %v40
    %95 = vmatprep.subr.mxu0 0.0
    %96 = vmatpush1.msra.mxu0 %v41
    %97 = vmatprep.subr.mxu0 0.0
    %98 = vmatpush1.msra.mxu0 %v42
    %99 = vmatprep.subr.mxu0 0.0
    %100 = vmatpush1.msra.mxu0 %v43
    %101 = vmatprep.subr.mxu0 0.0
    %102 = vmatpush1.msra.mxu0 %v44
    %103 = vmatprep.subr.mxu0 0.0
    %104 = vmatpush1.msra.mxu0 %v45
    %105 = vmatprep.subr.mxu0 0.0
    %106 = vmatpush1.msra.mxu0 %v46
    %107 = vmatprep.subr.mxu0 0.0
    %108 = vmatpush1.msra.mxu0 %v47
    %109 = vmatprep.subr.mxu0 0.0
    %110 = vmatpush1.msra.mxu0 %v48
    %111 = vmatprep.subr.mxu0 0.0
    %112 = vmatpush1.msra.mxu0 %v49
    %113 = vmatprep.subr.mxu0 0.0
    %114 = vmatpush1.msra.mxu0 %v50
    %115 = vmatprep.subr.mxu0 0.0
    %116 = vmatpush1.msra.mxu0 %v51
    %117 = vmatprep.subr.mxu0 0.0
    %118 = vmatpush1.msra.mxu0 %v52
    %119 = vmatprep.subr.mxu0 0.0
    %120 = vmatpush1.msra.mxu0 %v53
    %121 = vmatprep.subr.mxu0 0.0
    %122 = vmatpush1.msra.mxu0 %v54
    %123 = vmatprep.subr.mxu0 0.0
    %124 = vmatpush1.msra.mxu0 %v55
    %125 = vmatprep.subr.mxu0 0.0
    %126 = vmatpush1.msra.mxu0 %v56
    %127 = vmatprep.subr.mxu0 0.0
    %128 = vmatpush1.msra.mxu0 %v57
    %129 = vmatprep.mubr.f32.mxu0 %v25
    %130 = vmatmul.mubr.f32.gmra.mrb[0].mxu0 %v24
    %v131 = vpop.f32.mrb[0].mxu0
    %v132 = vadd.f32 %v63, %v131
    %v133 = vpop.f32.mrb[0].mxu0
    %134 = vdwg.mxu0
    %v135 = vmax.f32 %v132, 0.0
    %vm136 = vcmask 523264
    %137 = vst.msk [vmem:[#allocation2] sm:$0xff] %vm136, %v135
    %v138 = vld [vmem:[%s3] sm:$0xff]
    %v139 = vld [vmem:[%s3 + $0x8] sm:$0xff]
    %v140 = vld [vmem:[%s3 + $0x10] sm:$0xff]
    %v141 = vld [vmem:[%s3 + $0x18] sm:$0xff]
    %v142 = vld [vmem:[%s3 + $0x20] sm:$0xff]
    %v143 = vld [vmem:[%s3 + $0x28] sm:$0xff]
    %v144 = vld [vmem:[%s3 + $0x30] sm:$0xff]
    %v145 = vld [vmem:[%s3 + $0x38] sm:$0xff]
    %v146 = vld [vmem:[%s3 + $0x40] sm:$0xff]
    %v147 = vld [vmem:[%s3 + $0x48] sm:$0xff]
    %v148 = vld [vmem:[%s3 + $0x50] sm:$0xff]
    %v149 = vld [vmem:[%s3 + $0x58] sm:$0xff]
    %v150 = vld [vmem:[%s3 + $0x60] sm:$0xff]
    %v151 = vld [vmem:[%s3 + $0x68] sm:$0xff]
    %v152 = vld [vmem:[%s3 + $0x70] sm:$0xff]
    %v153 = vld [vmem:[%s3 + $0x78] sm:$0xff]
    %v154 = vld [vmem:[%s4] sm:$0x3]
    %v156 = vlaneseq
    %v157 = vshrl.u32 %v156, 7
    %v158 = vsub.s32 0, %v157
    %v159 = vrot.slane %v154, %v158
    %v160 = vlaneseq
    %v161 = vshrl.u32 %v160, 7
    %v162 = vsub.s32 1, %v161
    %v163 = vrot.slane %v154, %v162
    %v167 = vsel %vm136, %v135, 0
    %169 = vmatprep.subr.mxu0 %v139
    %170 = vmatpush1.msra.mxu0 %v138
    %171 = vmatprep.subr.mxu0 %v141
    %172 = vmatpush1.msra.mxu0 %v140
    %173 = vmatprep.subr.mxu0 %v143
    %174 = vmatpush1.msra.mxu0 %v142
    %175 = vmatprep.subr.mxu0 %v145
    %176 = vmatpush1.msra.mxu0 %v144
    %177 = vmatprep.subr.mxu0 %v147
    %178 = vmatpush1.msra.mxu0 %v146
    %179 = vmatprep.subr.mxu0 %v149
    %180 = vmatpush1.msra.mxu0 %v148
    %181 = vmatprep.subr.mxu0 %v151
    %182 = vmatpush1.msra.mxu0 %v150
    %183 = vmatprep.subr.mxu0 %v153
    %184 = vmatpush1.msra.mxu0 %v152
    %185 = vmatprep.subr.mxu0 0.0
    %186 = vmatpush1.msra.mxu0 0.0
    %187 = vmatprep.subr.mxu0 0.0
    %188 = vmatpush1.msra.mxu0 0.0
    %189 = vmatprep.subr.mxu0 0.0
    %190 = vmatpush1.msra.mxu0 0.0
    %191 = vmatprep.subr.mxu0 0.0
    %192 = vmatpush1.msra.mxu0 0.0
    %193 = vmatprep.subr.mxu0 0.0
    %194 = vmatpush1.msra.mxu0 0.0
    %195 = vmatprep.subr.mxu0 0.0
    %196 = vmatpush1.msra.mxu0 0.0
    %197 = vmatprep.subr.mxu0 0.0
    %198 = vmatpush1.msra.mxu0 0.0
    %199 = vmatprep.subr.mxu0 0.0
    %200 = vmatpush1.msra.mxu0 0.0
    %201 = vmatprep.subr.mxu0 0.0
    %202 = vmatpush1.msra.mxu0 0.0
    %203 = vmatprep.subr.mxu0 0.0
    %204 = vmatpush1.msra.mxu0 0.0
    %205 = vmatprep.subr.mxu0 0.0
    %206 = vmatpush1.msra.mxu0 0.0
    %207 = vmatprep.subr.mxu0 0.0
    %208 = vmatpush1.msra.mxu0 0.0
    %209 = vmatprep.subr.mxu0 0.0
    %210 = vmatpush1.msra.mxu0 0.0
    %211 = vmatprep.subr.mxu0 0.0
    %212 = vmatpush1.msra.mxu0 0.0
    %213 = vmatprep.subr.mxu0 0.0
    %214 = vmatpush1.msra.mxu0 0.0
    %215 = vmatprep.subr.mxu0 0.0
    %216 = vmatpush1.msra.mxu0 0.0
    %217 = vmatprep.subr.mxu0 0.0
    %218 = vmatpush1.msra.mxu0 0.0
    %219 = vmatprep.subr.mxu0 0.0
    %220 = vmatpush1.msra.mxu0 0.0
    %221 = vmatprep.subr.mxu0 0.0
    %222 = vmatpush1.msra.mxu0 0.0
    %223 = vmatprep.subr.mxu0 0.0
    %224 = vmatpush1.msra.mxu0 0.0
    %225 = vmatprep.subr.mxu0 0.0
    %226 = vmatpush1.msra.mxu0 0.0
    %227 = vmatprep.subr.mxu0 0.0
    %228 = vmatpush1.msra.mxu0 0.0
    %229 = vmatprep.subr.mxu0 0.0
    %230 = vmatpush1.msra.mxu0 0.0
    %231 = vmatprep.subr.mxu0 0.0
    %232 = vmatpush1.msra.mxu0 0.0
    %233 = vmatprep.mubr.f32.mxu0 0.0
    %234 = vmatmul.mubr.f32.gmra.mrb[0].mxu0 %v167
    %v235 = vpop.f32.mrb[0].mxu0
    %v236 = vadd.f32 %v159, %v235
    %v237 = vpop.f32.mrb[0].mxu0
    %v238 = vadd.f32 %v163, %v237
    %239 = vdwg.mxu0
    %v240 = vxor.u32 %v236, 2147483648
    %v241 = vxor.u32 %v238, 2147483648
    %v242 = vmul.f32 %v240, 1.442695
    %v243 = vpow.pop %v242
    %v244 = vmul.f32 %v241, 1.442695
    %v245 = vpow.pop %v244
    %v246 = vadd.f32 %v243, 1.0
    %v247 = vadd.f32 %v245, 1.0
    %v248 = vrcp.pop %v246
    %v249 = vmul.f32 1.0, %v248
    %v250 = vrcp.pop %v247
    %v251 = vmul.f32 1.0, %v250
    %252 = vst [vmem:[#allocation4] sm:$0xff] %v249
    %253 = vst [vmem:[#allocation4 + $0x8] sm:$0xff] %v251
    // Predicated region
    $region22: #{tpu_custom_call.1} parent=1 // pred_check
      _
    $region23: #{tpu_custom_call.1} parent=1 // pred_check_branch
      %255 = sbr.rel (0) target = $region25
    $region24: #{tpu_custom_call.1} parent=1 // pred_region
      %s257 = ssub.s32 128, 128
      %258 = vsyncadd [#allocation3], %s257
      %s260 = sshll.u32 [#allocation2], 4
      %s261 = int_to_ptr.vmem [resolvable:$true] %s260
      %263 = dma.vmem_to_hbm [thread:$0]  %s261, 128, %s5, [#allocation3]
    $region25: #{tpu_custom_call.1} parent=1 // pred_fallthru
      _
    // Predicated region
    $region26: #{tpu_custom_call.1} parent=1 // pred_check
      _
    $region27: #{tpu_custom_call.1} parent=1 // pred_check_branch
      %265 = sbr.rel (0) target = $region29
    $region28: #{tpu_custom_call.1} parent=1 // pred_region
      %s267 = ssub.s32 256, 256
      %268 = vsyncadd [#allocation5], %s267
      %s270 = sshll.u32 [#allocation4], 4
      %s271 = int_to_ptr.vmem [resolvable:$true] %s270
      %273 = dma.vmem_to_hbm [thread:$0]  %s271, 256, %s6, [#allocation5]
    $region29: #{tpu_custom_call.1} parent=1 // pred_fallthru
      _
    // Predicated region
    $region30: #{tpu_custom_call.1} parent=1 // pred_check
      _
    $region31: #{tpu_custom_call.1} parent=1 // pred_check_branch
      %275 = sbr.rel (0) target = $region33
    $region32: #{tpu_custom_call.1} parent=1 // pred_region
      %276 = dma.done [#allocation3], 128
    $region33: #{tpu_custom_call.1} parent=1 // pred_fallthru
      _
    // Predicated region
    $region34: #{tpu_custom_call.1} parent=1 // pred_check
      _
    $region35: #{tpu_custom_call.1} parent=1 // pred_check_branch
      %278 = sbr.rel (0) target = $region37
    $region36: #{tpu_custom_call.1} parent=1 // pred_region
      %279 = dma.done [#allocation5], 256
    $region37: #{tpu_custom_call.1} parent=1 // pred_fallthru
      _
    %280 = vsyncpa [#allocation3], 1
    %281 = vsyncpa [#allocation5], 1

</llo_original>
